<compile_context>
chip_gen: v6e
topology: v6e:2x2x1
jax: 0.10.0
libtpu: 0.0.40
codegen_flags: <defaults>
</compile_context>

<pallas_src>
import functools
from math import sqrt

import jax
import jax.numpy as jnp
from jax.experimental import pallas as pl
from jax.experimental.pallas import tpu as pltpu


def _round_up(x, m):
    return ((x + m - 1) // m) * m


def _choose_tb(B):
    """Pick a batch tile: as large as useful (<=512 rows), multiple of 8,
    and preferring >= 2 grid steps so both v7x TensorCores get work."""
    if B <= 16:
        return _round_up(B, 8)
    half = -(-B // 2)
    return min(512, _round_up(half, 8))


# ----------------------------- kernels --------------------------------------


def fused_autoencoder_kernel(x_ref, w_ref, b_ref, out_ref):
    """out = x @ (W_enc @ W_dec) + (b_enc @ W_dec + b_dec): one MXU matmul."""
    acc = jnp.dot(x_ref[...], w_ref[...], preferred_element_type=jnp.float32)
    out_ref[...] = (acc + b_ref[...]).astype(out_ref.dtype)


def two_layer_autoencoder_kernel(
    x_ref, w_enc_ref, b_enc_ref, w_dec_ref, b_dec_ref, out_ref
):
    """Faithful two-dot path: encoder then decoder, f32 accumulation."""
    encoded = (
        jnp.dot(x_ref[...], w_enc_ref[...], preferred_element_type=jnp.float32)
        + b_enc_ref[...]
    )
    decoded = (
        jnp.dot(
            encoded.astype(w_dec_ref.dtype),
            w_dec_ref[...],
            preferred_element_type=jnp.float32,
        )
        + b_dec_ref[...]
    )
    out_ref[...] = decoded.astype(out_ref.dtype)


# ----------------------------- wrapper ---------------------------------------


@functools.partial(jax.jit, static_argnames=("tb", "fuse"))
def autoencoder_forward(x, w_enc, b_enc, w_dec, b_dec, *, tb=None, fuse=True):
    """Matches PyTorch: decoder(encoder(x)) with y = x @ W.T + b semantics
    (weights here are stored pre-transposed: w_enc (in_out, latent),
    w_dec (latent, in_out))."""
    B, in_out = x.shape
    latent = w_enc.shape[1]

    if tb is None:
        tb = _choose_tb(B)
    grid_steps = pl.cdiv(B, tb)
    B_pad = grid_steps * tb

    # Pad the batch so any B works with a large tile; padded rows are sliced
    # off the output (they are finite garbage, never read).
    if B_pad != B:
        x = jnp.pad(x, ((0, B_pad - B), (0, 0)))

    # bf16 operands for the MXU, f32 accumulation / biases.
    x_c = x.astype(jnp.bfloat16)
    out_dtype = jnp.float32 if x.dtype == jnp.float32 else x.dtype

    compiler_params = pltpu.CompilerParams(
        dimension_semantics=("parallel",),
        # Re-derived budget: (x bf16 + out f32) tiles, double-buffered, plus
        # resident weights is only a few MiB at tb<=512; 32 MiB is safely
        # within v7x's 64 MiB per-TC VMEM (and v5e/v6e's 128 MiB).
        vmem_limit_bytes=32 * 1024 * 1024,
    )

    if fuse:
        # Fold the two low-rank (latent=64) matmuls into one in_out x in_out
        # matmul: better MXU shape on 128/256-wide arrays, single pass over x.
        w_enc_f32 = w_enc.astype(jnp.float32)
        w_dec_f32 = w_dec.astype(jnp.float32)
        w_comb = jnp.dot(w_enc_f32, w_dec_f32).astype(jnp.bfloat16)
        b_comb = (
            jnp.dot(b_enc.astype(jnp.float32), w_dec_f32) + b_dec.astype(jnp.float32)
        )

        out = pl.pallas_call(
            fused_autoencoder_kernel,
            out_shape=jax.ShapeDtypeStruct((B_pad, in_out), out_dtype),
            grid_spec=pltpu.PrefetchScalarGridSpec(
                num_scalar_prefetch=0,
                grid=(grid_steps,),
                in_specs=[
                    pl.BlockSpec((tb, in_out), lambda i: (i, 0)),
                    pl.BlockSpec((in_out, in_out), lambda i: (0, 0)),
                    pl.BlockSpec((1, in_out), lambda i: (0, 0)),
                ],
                out_specs=pl.BlockSpec((tb, in_out), lambda i: (i, 0)),
            ),
            compiler_params=compiler_params,
        )(x_c, w_comb, b_comb)
    else:
        w_enc_c = w_enc.astype(jnp.bfloat16)
        w_dec_c = w_dec.astype(jnp.bfloat16)
        b_enc_c = b_enc.astype(jnp.float32)
        b_dec_c = b_dec.astype(jnp.float32)

        out = pl.pallas_call(
            two_layer_autoencoder_kernel,
            out_shape=jax.ShapeDtypeStruct((B_pad, in_out), out_dtype),
            grid_spec=pltpu.PrefetchScalarGridSpec(
                num_scalar_prefetch=0,
                grid=(grid_steps,),
                in_specs=[
                    pl.BlockSpec((tb, in_out), lambda i: (i, 0)),
                    # Grid-invariant weights/biases (constant index_map).
                    pl.BlockSpec((in_out, latent), lambda i: (0, 0)),
                    pl.BlockSpec((1, latent), lambda i: (0, 0)),
                    pl.BlockSpec((latent, in_out), lambda i: (0, 0)),
                    pl.BlockSpec((1, in_out), lambda i: (0, 0)),
                ],
                out_specs=pl.BlockSpec((tb, in_out), lambda i: (i, 0)),
            ),
            compiler_params=compiler_params,
        )(x_c, w_enc_c, b_enc_c, w_dec_c, b_dec_c)

    if B_pad != B:
        out = out[:B]
    return out


def init_params(key, in_out, latent_dims, dtype=jnp.float32):
    """Deterministic init mimicking PyTorch nn.Linear (uniform +/- 1/sqrt(fan_in)).
    Weights stored transposed relative to PyTorch's (out, in) layout."""
    k1, k2, k3, k4 = jax.random.split(key, 4)
    bound_enc = 1.0 / sqrt(in_out)
    bound_dec = 1.0 / sqrt(latent_dims)
    w_enc = jax.random.uniform(k1, (in_out, latent_dims), dtype, -bound_enc, bound_enc)
    b_enc = jax.random.uniform(k2, (1, latent_dims), dtype, -bound_enc, bound_enc)
    w_dec = jax.random.uniform(k3, (latent_dims, in_out), dtype, -bound_dec, bound_dec)
    b_dec = jax.random.uniform(k4, (1, in_out), dtype, -bound_dec, bound_dec)
    return w_enc, b_enc, w_dec, b_dec


if __name__ == "__main__":
    key = jax.random.PRNGKey(0)
    kx, kp = jax.random.split(key)

    B = 256          # batch of flattened one-hot rows (small demo shape)
    in_out = 256     # input/output feature size
    latent_dims = 64 # matches module-level latent_dims

    x = jax.random.normal(kx, (B, in_out), jnp.float32)
    w_enc, b_enc, w_dec, b_dec = init_params(kp, in_out, latent_dims)

    out_fused = jax.block_until_ready(
        autoencoder_forward(x, w_enc, b_enc, w_dec, b_dec, fuse=True)
    )
    out_two = jax.block_until_ready(
        autoencoder_forward(x, w_enc, b_enc, w_dec, b_dec, fuse=False)
    )

    # Reference in plain f32 JAX (same semantics as PyTorch forward).
    ref = (x @ w_enc + b_enc) @ w_dec + b_dec

    assert out_fused.shape == (B, in_out)
    assert out_two.shape == (B, in_out)
    # bf16 matmul operands (f32 accumulation) -> loosened tolerance vs f32 ref.
    assert jnp.allclose(out_two, ref, atol=3e-2, rtol=3e-2), "two-layer mismatch"
    assert jnp.allclose(out_fused, ref, atol=3e-2, rtol=3e-2), "fused mismatch"

    print("KERNEL_OK")
</pallas_src>

<mosaic_0001>
module attributes {stable_mosaic.version = 11 : i64} {
  func.func @fused_autoencoder_kernel(%arg0: i32, %arg1: memref<128x256xbf16, #tpu.memory_space<vmem>>, %arg2: memref<256x256xbf16, #tpu.memory_space<vmem>>, %arg3: memref<1x256xf32, #tpu.memory_space<vmem>>, %arg4: memref<128x256xf32, #tpu.memory_space<vmem>>) attributes {dimension_semantics = [#tpu.dimension_semantics<parallel>], iteration_bounds = array<i64: 2>, scalar_prefetch = 0 : i64, scratch_operands = 0 : i64, tpu.core_type = #tpu.core_type<tc>, window_params = [{transform_indices = @transform_0, window_bounds = array<i64: 128, 256>}, {pipeline_mode = #tpu.pipeline_mode<synchronous>, transform_indices = @transform_1, window_bounds = array<i64: 256, 256>}, {pipeline_mode = #tpu.pipeline_mode<synchronous>, transform_indices = @transform_2, window_bounds = array<i64: 1, 256>}, {transform_indices = @transform_3, window_bounds = array<i64: 128, 256>}]} {
    %c0 = arith.constant 0 : index
    %c0_0 = arith.constant 0 : index
    %0 = vector.load %arg1[%c0, %c0_0] : memref<128x256xbf16, #tpu.memory_space<vmem>>, vector<128x256xbf16>
    %c0_1 = arith.constant 0 : index
    %c0_2 = arith.constant 0 : index
    %1 = vector.load %arg2[%c0_1, %c0_2] : memref<256x256xbf16, #tpu.memory_space<vmem>>, vector<256x256xbf16>
    %cst = arith.constant dense<0.000000e+00> : vector<128x256xf32>
    %2 = tpu.matmul %0, %1, %cst {dimension_numbers = #tpu.dot_dimension_numbers<[1], [0], [0], [1], [0, 0, 1, 1], [], []>} : vector<128x256xbf16>, vector<256x256xbf16>, vector<128x256xf32> -> vector<128x256xf32>
    %c0_3 = arith.constant 0 : index
    %c0_4 = arith.constant 0 : index
    %3 = vector.load %arg3[%c0_3, %c0_4] : memref<1x256xf32, #tpu.memory_space<vmem>>, vector<1x256xf32>
    %4 = vector.broadcast %3 : vector<1x256xf32> to vector<128x256xf32>
    %5 = arith.addf %2, %4 : vector<128x256xf32>
    %c0_5 = arith.constant 0 : index
    %c0_6 = arith.constant 0 : index
    %6 = vector.load %arg4[%c0_5, %c0_6] : memref<128x256xf32, #tpu.memory_space<vmem>>, vector<128x256xf32>
    tpu.vector_store %arg4[%c0_5, %c0_6], %5 {strides = array<i32>} : memref<128x256xf32, #tpu.memory_space<vmem>>, vector<128x256xf32>,
    return
  }
  func.func @transform_0(%arg0: i32) -> (i32, i32) {
    %c0_i32 = arith.constant 0 : i32
    %c0_i32_0 = arith.constant 0 : i32
    return %arg0, %c0_i32 : i32, i32
  }
  func.func @transform_1(%arg0: i32) -> (i32, i32) {
    %c0_i32 = arith.constant 0 : i32
    %c0_i32_0 = arith.constant 0 : i32
    %c0_i32_1 = arith.constant 0 : i32
    return %c0_i32, %c0_i32_0 : i32, i32
  }
  func.func @transform_2(%arg0: i32) -> (i32, i32) {
    %c0_i32 = arith.constant 0 : i32
    %c0_i32_0 = arith.constant 0 : i32
    %c0_i32_1 = arith.constant 0 : i32
    return %c0_i32, %c0_i32_0 : i32, i32
  }
  func.func @transform_3(%arg0: i32) -> (i32, i32) {
    %c0_i32 = arith.constant 0 : i32
    %c0_i32_0 = arith.constant 0 : i32
    return %arg0, %c0_i32 : i32, i32
  }
}

</mosaic_0001>

<llo_original>
// kernel: autoencoder_forward.1
$region0: #{autoencoder_forward.1}
  #allocation0 [shape = 'u32[]', space=smem, size = 0x4, offset = 0x4, fixed_abs, tag = 'smem constant byte address 0x4 - core index']
  #allocation1 [shape = 'u32[144,128]{1,0:T(1,128)}', space=vmem, size = 0x12000, scoped, tag = 'internal scratch']
  %s0 = inlined_call_operand.vmem [shape: bf16[256,256], index: 0, kind: input, shape index: {}]
  %s1 = inlined_call_operand.vmem [shape: bf16[256,256], index: 1, kind: input, shape index: {}]
  %s2 = inlined_call_operand.vmem [shape: f32[1,256], index: 2, kind: input, shape index: {}]
  %s3 = inlined_call_operand.hbm [shape: f32[256,256], index: 3, kind: output, shape index: {}]
  %s4 = sld [smem:[#allocation0]]
  $region45: #{autoencoder_forward.1} parent=0
    _
  %s6 = ssub.s32 1, %s4
  %s7 = scalar_select 0, %s6, %s4
  $region1: #{autoencoder_forward.1} parent=0
    #allocation2 [shape = 'u8[262144]{0}', space=vmem, size = 0x40000, scoped, tag = 'output window, operand 0']
    #allocation3 [shape = 's32[2]{0}', space=sflag, size = 0x8, scoped, tag = 'scoped memory for autoencoder_forward.1']
    %8 = vsyncpa [#allocation3], 0
    %s9 = scalar_lea.sflag [#allocation3], 1
    %10 = vsyncpa %s9, 0
    loop: start=0, step=1, limit=4
    $region2: #{autoencoder_forward.1} parent=1 // loop_pre_header
      _
    $region3: #{autoencoder_forward.1} parent=1 // loop_header
      %s12 = sphi 0, %s16
      %p13 = scmp.ge.s32.totalorder %s12, 4
      %s22 = sphi 0, %s24
      %s25 = sphi 0, %s22
      %s26 = sphi 0, %s25
      %s42 = sphi 0, %s26
      %s46 = sphi 0, %s46
      %s48 = sphi 0, %s46
      %s49 = sphi 0, %s48
      %s63 = sphi 0, %s49
      %s67 = sphi 0, %s67
      %s69 = sphi 0, %s67
      %s70 = sphi 0, %s69
      %s84 = sphi 0, %s70
      %s90 = sphi 0, %s92
      %s93 = sphi 0, %s90
      %s94 = sphi 0, %s93
      %s110 = sphi 0, %s94
    $region4: #{autoencoder_forward.1} parent=1 // loop_header_branch
      %15 = sbr.rel (%p13) target = $region8
    $region5: #{autoencoder_forward.1} parent=1 // loop_body
      %s17 = ssub.s32 %s12, 1
      %s18 = ssub.s32 %s12, 2
      %s19 = sadd.s32 %s12, 1
      %s20 = ssub.s32 %s12, %s19
      %p21 = scmp.eq.s32.totalorder %s20, 0
      %s23 = sadd.s32 %s22, 1
      %s24 = scalar_select %p21, %s22, %s23
      %p27 = pneg %p21
      %p28 = scmp.eq.s32.totalorder %s12, 1
      %p29 = por %p27, %p28
      %p30 = scmp.ne.s32.totalorder %s22, %s25
      %p31 = scmp.eq.s32.totalorder %s12, 0
      %p32 = por %p30, %p31
      %p33 = scmp.ne.s32.totalorder %s22, %s25
      %p34 = scmp.eq.s32.totalorder %s17, 1
      %p35 = por %p33, %p34
      %p36 = scmp.ne.s32.totalorder %s25, %s26
      %p37 = scmp.eq.s32.totalorder %s17, 0
      %p38 = por %p36, %p37
      %p39 = scmp.ne.s32.totalorder %s25, %s26
      %p40 = scmp.eq.s32.totalorder %s18, 1
      %p41 = por %p39, %p40
      %p43 = scmp.ne.s32.totalorder %s26, %s42
      %p44 = scmp.eq.s32.totalorder %s18, 0
      %p45 = por %p43, %p44
      %s47 = sadd.s32 %s46, 1
      %p50 = scmp.eq.s32.totalorder %s12, 1
      %p51 = scmp.ne.s32.totalorder %s46, %s48
      %p52 = scmp.eq.s32.totalorder %s12, 0
      %p53 = por %p51, %p52
      %p54 = scmp.ne.s32.totalorder %s46, %s48
      %p55 = scmp.eq.s32.totalorder %s17, 1
      %p56 = por %p54, %p55
      %p57 = scmp.ne.s32.totalorder %s48, %s49
      %p58 = scmp.eq.s32.totalorder %s17, 0
      %p59 = por %p57, %p58
      %p60 = scmp.ne.s32.totalorder %s48, %s49
      %p61 = scmp.eq.s32.totalorder %s18, 1
      %p62 = por %p60, %p61
      %p64 = scmp.ne.s32.totalorder %s49, %s63
      %p65 = scmp.eq.s32.totalorder %s18, 0
      %p66 = por %p64, %p65
      %s68 = sadd.s32 %s67, 1
      %p71 = scmp.eq.s32.totalorder %s12, 1
      %p72 = scmp.ne.s32.totalorder %s67, %s69
      %p73 = scmp.eq.s32.totalorder %s12, 0
      %p74 = por %p72, %p73
      %p75 = scmp.ne.s32.totalorder %s67, %s69
      %p76 = scmp.eq.s32.totalorder %s17, 1
      %p77 = por %p75, %p76
      %p78 = scmp.ne.s32.totalorder %s69, %s70
      %p79 = scmp.eq.s32.totalorder %s17, 0
      %p80 = por %p78, %p79
      %p81 = scmp.ne.s32.totalorder %s69, %s70
      %p82 = scmp.eq.s32.totalorder %s18, 1
      %p83 = por %p81, %p82
      %p85 = scmp.ne.s32.totalorder %s70, %s84
      %p86 = scmp.eq.s32.totalorder %s18, 0
      %p87 = por %p85, %p86
      %s88 = ssub.s32 %s12, %s19
      %p89 = scmp.eq.s32.totalorder %s88, 0
      %s91 = sadd.s32 %s90, 1
      %s92 = scalar_select %p89, %s90, %s91
      %p95 = pneg %p89
      %p96 = scmp.eq.s32.totalorder %s12, 1
      %p97 = por %p95, %p96
      %p98 = scmp.ne.s32.totalorder %s90, %s93
      %p99 = scmp.eq.s32.totalorder %s12, 0
      %p100 = por %p98, %p99
      %p101 = scmp.ne.s32.totalorder %s90, %s93
      %p102 = scmp.eq.s32.totalorder %s17, 1
      %p103 = por %p101, %p102
      %p104 = scmp.ne.s32.totalorder %s93, %s94
      %p105 = scmp.eq.s32.totalorder %s17, 0
      %p106 = por %p104, %p105
      %p107 = scmp.ne.s32.totalorder %s93, %s94
      %p108 = scmp.eq.s32.totalorder %s18, 1
      %p109 = por %p107, %p108
      %p111 = scmp.ne.s32.totalorder %s94, %s110
      %p112 = scmp.eq.s32.totalorder %s18, 0
      %p113 = por %p111, %p112
      %p114 = scmp.le.s32.totalorder 1, %s12
      %p115 = scmp.lt.s32.totalorder %s12, 3
      %p116 = pnand %p114, %p115
      %p117 = pneg %p116
      // Predicated region
      $region9: #{autoencoder_forward.1} parent=5 // pred_check
        _
      $region10: #{autoencoder_forward.1} parent=5 // pred_check_branch
        %119 = sbr.rel (%p116) target = $region12
      $region11: #{autoencoder_forward.1} parent=5 // pred_region
        %s120 = ssub.s32 %s12, 1
        // Predicated region
        $region13: #{autoencoder_forward.1} parent=11 // pred_check
          %p121 = pneg %p59
        $region14: #{autoencoder_forward.1} parent=11 // pred_check_branch
          %123 = sbr.rel (%p121) target = $region16
        $region15: #{autoencoder_forward.1} parent=11 // pred_region
          _
        $region16: #{autoencoder_forward.1} parent=11 // pred_fallthru
          _
        // Predicated region
        $region17: #{autoencoder_forward.1} parent=11 // pred_check
          %p124 = pneg %p80
        $region18: #{autoencoder_forward.1} parent=11 // pred_check_branch
          %126 = sbr.rel (%p124) target = $region20
        $region19: #{autoencoder_forward.1} parent=11 // pred_region
          _
        $region20: #{autoencoder_forward.1} parent=11 // pred_fallthru
          _
      $region12: #{autoencoder_forward.1} parent=5 // pred_fallthru
        _
      %p127 = scmp.lt.s32.totalorder %s12, 2
      // Predicated region
      $region21: #{autoencoder_forward.1} parent=5 // pred_check
        %p128 = pneg %p127
      $region22: #{autoencoder_forward.1} parent=5 // pred_check_branch
        %130 = sbr.rel (%p128) target = $region24
      $region23: #{autoencoder_forward.1} parent=5 // pred_region
        // Predicated region
        $region25: #{autoencoder_forward.1} parent=23 // pred_check
          %p131 = pneg %p32
        $region26: #{autoencoder_forward.1} parent=23 // pred_check_branch
          %133 = sbr.rel (%p131) target = $region28
        $region27: #{autoencoder_forward.1} parent=23 // pred_region
          %s134 = smul.u32 16, %s12
          %p135 = scmp.lt.s32.totalorder %s134, 31
          %s136 = scalar_select %p135, %s134, 31
          %s137 = smul.addr %s136, 2
          %s138 = smul.addr %s137, 4
          %s139 = scalar_lea.vmem %s0, %s138
          %s140 = smul.u32 16, %s12
        $region28: #{autoencoder_forward.1} parent=23 // pred_fallthru
          _
      $region24: #{autoencoder_forward.1} parent=5 // pred_fallthru
        _
      %p141 = scmp.le.s32.totalorder 1, %s12
      %p142 = scmp.lt.s32.totalorder %s12, 3
      %p143 = pnand %p141, %p142
      %p144 = pneg %p143
      // Predicated region
      $region29: #{autoencoder_forward.1} parent=5 // pred_check
        _
      $region30: #{autoencoder_forward.1} parent=5 // pred_check_branch
        %146 = sbr.rel (%p143) target = $region32
      $region31: #{autoencoder_forward.1} parent=5 // pred_region
        %s147 = ssub.s32 %s12, 1
        %s148 = smul.u32 16, %s17
        %p149 = scmp.lt.s32.totalorder %s148, 31
        %s150 = scalar_select %p149, %s148, 31
        %s151 = smul.addr %s150, 2
        %s152 = smul.addr %s151, 4
        %s153 = scalar_lea.vmem %s0, %s152
        %p154 = pneg %p38
        %p155 = pneg %p35
        %p156 = pneg %p59
        %p157 = pneg %p56
        %p158 = pneg %p80
        %p159 = pneg %p77
        %p160 = pneg %p106
        %p161 = pneg %p103
        %s162 = sand.u32 %s93, 1
        %s163 = scalar_lea.sflag [#allocation3], %s162
        %s164 = sand.u32 %s93, 1
        %s165 = smul.addr %s164, 256
        %s166 = scalar_lea.vmem [#allocation2], %s165
        %s167 = smul.u32 16, %s17
        %p168 = scmp.lt.s32.totalorder %s167, 31
        %s169 = scalar_select %p168, %s167, 31
        %s170 = smul.addr %s169, 2
        %s171 = smul.addr %s170, 4
        %s172 = scalar_lea.vmem %s0, %s171
        %s173 = smul.u32 16, %s17
        %s174 = smul.u32 16, %s17
        %v175 = vld [vmem:[%s172] sm:$0xff]
        %v176 = vld [vmem:[%s172 + $0x8] sm:$0xff]
        %v177 = vld [vmem:[%s172 + $0x10] sm:$0xff]
        %v178 = vld [vmem:[%s172 + $0x18] sm:$0xff]
        %v179 = vld [vmem:[%s172 + $0x20] sm:$0xff]
        %v180 = vld [vmem:[%s172 + $0x28] sm:$0xff]
        %v181 = vld [vmem:[%s172 + $0x30] sm:$0xff]
        %v182 = vld [vmem:[%s172 + $0x38] sm:$0xff]
        %v183 = vld [vmem:[%s172 + $0x40] sm:$0xff]
        %v184 = vld [vmem:[%s172 + $0x48] sm:$0xff]
        %v185 = vld [vmem:[%s172 + $0x50] sm:$0xff]
        %v186 = vld [vmem:[%s172 + $0x58] sm:$0xff]
        %v187 = vld [vmem:[%s172 + $0x60] sm:$0xff]
        %v188 = vld [vmem:[%s172 + $0x68] sm:$0xff]
        %v189 = vld [vmem:[%s172 + $0x70] sm:$0xff]
        %v190 = vld [vmem:[%s172 + $0x78] sm:$0xff]
        %v191 = vld [vmem:[%s1] sm:$0xff]
        %v192 = vld [vmem:[%s1 + $0x8] sm:$0xff]
        %v193 = vld [vmem:[%s1 + $0x10] sm:$0xff]
        %v194 = vld [vmem:[%s1 + $0x18] sm:$0xff]
        %v195 = vld [vmem:[%s1 + $0x20] sm:$0xff]
        %v196 = vld [vmem:[%s1 + $0x28] sm:$0xff]
        %v197 = vld [vmem:[%s1 + $0x30] sm:$0xff]
        %v198 = vld [vmem:[%s1 + $0x38] sm:$0xff]
        %v199 = vld [vmem:[%s1 + $0x40] sm:$0xff]
        %v200 = vld [vmem:[%s1 + $0x48] sm:$0xff]
        %v201 = vld [vmem:[%s1 + $0x50] sm:$0xff]
        %v202 = vld [vmem:[%s1 + $0x58] sm:$0xff]
        %v203 = vld [vmem:[%s1 + $0x60] sm:$0xff]
        %v204 = vld [vmem:[%s1 + $0x68] sm:$0xff]
        %v205 = vld [vmem:[%s1 + $0x70] sm:$0xff]
        %v206 = vld [vmem:[%s1 + $0x78] sm:$0xff]
        %v207 = vld [vmem:[%s1 + $0x80] sm:$0xff]
        %v208 = vld [vmem:[%s1 + $0x88] sm:$0xff]
        %v209 = vld [vmem:[%s1 + $0x90] sm:$0xff]
        %v210 = vld [vmem:[%s1 + $0x98] sm:$0xff]
        %v211 = vld [vmem:[%s1 + $0xa0] sm:$0xff]
        %v212 = vld [vmem:[%s1 + $0xa8] sm:$0xff]
        %v213 = vld [vmem:[%s1 + $0xb0] sm:$0xff]
        %v214 = vld [vmem:[%s1 + $0xb8] sm:$0xff]
        %v215 = vld [vmem:[%s1 + $0xc0] sm:$0xff]
        %v216 = vld [vmem:[%s1 + $0xc8] sm:$0xff]
        %v217 = vld [vmem:[%s1 + $0xd0] sm:$0xff]
        %v218 = vld [vmem:[%s1 + $0xd8] sm:$0xff]
        %v219 = vld [vmem:[%s1 + $0xe0] sm:$0xff]
        %v220 = vld [vmem:[%s1 + $0xe8] sm:$0xff]
        %v221 = vld [vmem:[%s1 + $0xf0] sm:$0xff]
        %v222 = vld [vmem:[%s1 + $0xf8] sm:$0xff]
        %v223 = vld [vmem:[%s2] sm:$0x3]
        %v225 = vlaneseq
        %v226 = vshrl.u32 %v225, 7
        %v227 = vsub.s32 0, %v226
        %v228 = vrot.slane %v223, %v227
        %v229 = vlaneseq
        %v230 = vshrl.u32 %v229, 7
        %v231 = vsub.s32 1, %v230
        %v232 = vrot.slane %v223, %v231
        %v251 = vunpack.c.l.b16 %v175
        %v252 = vunpack.c.h.b16 %v175
        %v253 = vunpack.c.l.b16 %v176
        %v254 = vunpack.c.h.b16 %v176
        %v255 = vunpack.c.l.b16 %v177
        %v256 = vunpack.c.h.b16 %v177
        %v257 = vunpack.c.l.b16 %v178
        %v258 = vunpack.c.h.b16 %v178
        %v259 = vunpack.c.l.b16 %v179
        %v260 = vunpack.c.h.b16 %v179
        %v261 = vunpack.c.l.b16 %v180
        %v262 = vunpack.c.h.b16 %v180
        %v263 = vunpack.c.l.b16 %v181
        %v264 = vunpack.c.h.b16 %v181
        %v265 = vunpack.c.l.b16 %v182
        %v266 = vunpack.c.h.b16 %v182
        %v267 = vunpack.c.l.b16 %v183
        %v268 = vunpack.c.h.b16 %v183
        %v269 = vunpack.c.l.b16 %v184
        %v270 = vunpack.c.h.b16 %v184
        %v271 = vunpack.c.l.b16 %v185
        %v272 = vunpack.c.h.b16 %v185
        %v273 = vunpack.c.l.b16 %v186
        %v274 = vunpack.c.h.b16 %v186
        %v275 = vunpack.c.l.b16 %v187
        %v276 = vunpack.c.h.b16 %v187
        %v277 = vunpack.c.l.b16 %v188
        %v278 = vunpack.c.h.b16 %v188
        %v279 = vunpack.c.l.b16 %v189
        %v280 = vunpack.c.h.b16 %v189
        %v281 = vunpack.c.l.b16 %v190
        %v282 = vunpack.c.h.b16 %v190
        %v283 = vpack.c.b16 %v253, %v251
        %v284 = vpack.c.b16 %v254, %v252
        %v285 = vpack.c.b16 %v257, %v255
        %v286 = vpack.c.b16 %v258, %v256
        %v287 = vpack.c.b16 %v261, %v259
        %v288 = vpack.c.b16 %v262, %v260
        %v289 = vpack.c.b16 %v265, %v263
        %v290 = vpack.c.b16 %v266, %v264
        %v291 = vpack.c.b16 %v269, %v267
        %v292 = vpack.c.b16 %v270, %v268
        %v293 = vpack.c.b16 %v273, %v271
        %v294 = vpack.c.b16 %v274, %v272
        %v295 = vpack.c.b16 %v277, %v275
        %v296 = vpack.c.b16 %v278, %v276
        %v297 = vpack.c.b16 %v281, %v279
        %v298 = vpack.c.b16 %v282, %v280
        %v347 = vunpack.c.l.b16 %v191
        %v348 = vunpack.c.h.b16 %v191
        %v349 = vunpack.c.l.b16 %v192
        %v350 = vunpack.c.h.b16 %v192
        %v351 = vunpack.c.l.b16 %v193
        %v352 = vunpack.c.h.b16 %v193
        %v353 = vunpack.c.l.b16 %v194
        %v354 = vunpack.c.h.b16 %v194
        %v355 = vunpack.c.l.b16 %v195
        %v356 = vunpack.c.h.b16 %v195
        %v357 = vunpack.c.l.b16 %v196
        %v358 = vunpack.c.h.b16 %v196
        %v359 = vunpack.c.l.b16 %v197
        %v360 = vunpack.c.h.b16 %v197
        %v361 = vunpack.c.l.b16 %v198
        %v362 = vunpack.c.h.b16 %v198
        %v363 = vunpack.c.l.b16 %v199
        %v364 = vunpack.c.h.b16 %v199
        %v365 = vunpack.c.l.b16 %v200
        %v366 = vunpack.c.h.b16 %v200
        %v367 = vunpack.c.l.b16 %v201
        %v368 = vunpack.c.h.b16 %v201
        %v369 = vunpack.c.l.b16 %v202
        %v370 = vunpack.c.h.b16 %v202
        %v371 = vunpack.c.l.b16 %v203
        %v372 = vunpack.c.h.b16 %v203
        %v373 = vunpack.c.l.b16 %v204
        %v374 = vunpack.c.h.b16 %v204
        %v375 = vunpack.c.l.b16 %v205
        %v376 = vunpack.c.h.b16 %v205
        %v377 = vunpack.c.l.b16 %v206
        %v378 = vunpack.c.h.b16 %v206
        %v379 = vunpack.c.l.b16 %v207
        %v380 = vunpack.c.h.b16 %v207
        %v381 = vunpack.c.l.b16 %v208
        %v382 = vunpack.c.h.b16 %v208
        %v383 = vunpack.c.l.b16 %v209
        %v384 = vunpack.c.h.b16 %v209
        %v385 = vunpack.c.l.b16 %v210
        %v386 = vunpack.c.h.b16 %v210
        %v387 = vunpack.c.l.b16 %v211
        %v388 = vunpack.c.h.b16 %v211
        %v389 = vunpack.c.l.b16 %v212
        %v390 = vunpack.c.h.b16 %v212
        %v391 = vunpack.c.l.b16 %v213
        %v392 = vunpack.c.h.b16 %v213
        %v393 = vunpack.c.l.b16 %v214
        %v394 = vunpack.c.h.b16 %v214
        %v395 = vunpack.c.l.b16 %v215
        %v396 = vunpack.c.h.b16 %v215
        %v397 = vunpack.c.l.b16 %v216
        %v398 = vunpack.c.h.b16 %v216
        %v399 = vunpack.c.l.b16 %v217
        %v400 = vunpack.c.h.b16 %v217
        %v401 = vunpack.c.l.b16 %v218
        %v402 = vunpack.c.h.b16 %v218
        %v403 = vunpack.c.l.b16 %v219
        %v404 = vunpack.c.h.b16 %v219
        %v405 = vunpack.c.l.b16 %v220
        %v406 = vunpack.c.h.b16 %v220
        %v407 = vunpack.c.l.b16 %v221
        %v408 = vunpack.c.h.b16 %v221
        %v409 = vunpack.c.l.b16 %v222
        %v410 = vunpack.c.h.b16 %v222
        %v411 = vpack.c.b16 %v349, %v347
        %v412 = vpack.c.b16 %v350, %v348
        %v413 = vpack.c.b16 %v353, %v351
        %v414 = vpack.c.b16 %v354, %v352
        %v415 = vpack.c.b16 %v357, %v355
        %v416 = vpack.c.b16 %v358, %v356
        %v417 = vpack.c.b16 %v361, %v359
        %v418 = vpack.c.b16 %v362, %v360
        %v419 = vpack.c.b16 %v365, %v363
        %v420 = vpack.c.b16 %v366, %v364
        %v421 = vpack.c.b16 %v369, %v367
        %v422 = vpack.c.b16 %v370, %v368
        %v423 = vpack.c.b16 %v373, %v371
        %v424 = vpack.c.b16 %v374, %v372
        %v425 = vpack.c.b16 %v377, %v375
        %v426 = vpack.c.b16 %v378, %v376
        %v427 = vpack.c.b16 %v381, %v379
        %v428 = vpack.c.b16 %v382, %v380
        %v429 = vpack.c.b16 %v385, %v383
        %v430 = vpack.c.b16 %v386, %v384
        %v431 = vpack.c.b16 %v389, %v387
        %v432 = vpack.c.b16 %v390, %v388
        %v433 = vpack.c.b16 %v393, %v391
        %v434 = vpack.c.b16 %v394, %v392
        %v435 = vpack.c.b16 %v397, %v395
        %v436 = vpack.c.b16 %v398, %v396
        %v437 = vpack.c.b16 %v401, %v399
        %v438 = vpack.c.b16 %v402, %v400
        %v439 = vpack.c.b16 %v405, %v403
        %v440 = vpack.c.b16 %v406, %v404
        %v441 = vpack.c.b16 %v409, %v407
        %v442 = vpack.c.b16 %v410, %v408
        %475 = vmatprep.subr.bf16.mxu0 %v426
        %476 = vmatpush1.bf16.msra.mxu0 %v425
        %477 = vmatprep.subr.bf16.mxu0 %v424
        %478 = vmatpush1.bf16.msra.mxu0 %v423
        %479 = vmatprep.subr.bf16.mxu0 %v422
        %480 = vmatpush1.bf16.msra.mxu0 %v421
        %481 = vmatprep.subr.bf16.mxu0 %v420
        %482 = vmatpush1.bf16.msra.mxu0 %v419
        %483 = vmatprep.subr.bf16.mxu0 %v418
        %484 = vmatpush1.bf16.msra.mxu0 %v417
        %485 = vmatprep.subr.bf16.mxu0 %v416
        %486 = vmatpush1.bf16.msra.mxu0 %v415
        %487 = vmatprep.subr.bf16.mxu0 %v414
        %488 = vmatpush1.bf16.msra.mxu0 %v413
        %489 = vmatprep.subr.bf16.mxu0 %v412
        %490 = vmatpush1.bf16.msra.mxu0 %v411
        %491 = vmatprep.subr.bf16.mxu0 %v442
        %492 = vmatpush2.bf16.msra.mxu0 %v441
        %493 = vmatprep.subr.bf16.mxu0 %v440
        %494 = vmatpush2.bf16.msra.mxu0 %v439
        %495 = vmatprep.subr.bf16.mxu0 %v438
        %496 = vmatpush2.bf16.msra.mxu0 %v437
        %497 = vmatprep.subr.bf16.mxu0 %v436
        %498 = vmatpush2.bf16.msra.mxu0 %v435
        %499 = vmatprep.subr.bf16.mxu0 %v434
        %500 = vmatpush2.bf16.msra.mxu0 %v433
        %501 = vmatprep.subr.bf16.mxu0 %v432
        %502 = vmatpush2.bf16.msra.mxu0 %v431
        %503 = vmatprep.subr.bf16.mxu0 %v430
        %504 = vmatpush2.bf16.msra.mxu0 %v429
        %505 = vmatprep.subr.bf16.mxu0 %v428
        %506 = vmatpush2.bf16.msra.mxu0 %v427
        %507 = vmatprep.mubr.bf16.mxu0 %v284
        %508 = vmatmul.mubr.bf16.gmra.mxu0 %v283
        %v509 = vpop.f32.mrf.mxu0
        %v510 = vadd.f32 %v228, %v509
        %v511 = vpop.f32.mrf.mxu0
        %v512 = vadd.f32 %v232, %v511
        %v513 = vpop.f32.mrf.mxu0
        %v514 = vadd.f32 %v228, %v513
        %v515 = vpop.f32.mrf.mxu0
        %v516 = vadd.f32 %v232, %v515
        %517 = vmatprep.mubr.bf16.mxu0 %v286
        %518 = vmatmul.mubr.bf16.gmra.mxu0 %v285
        %v519 = vpop.f32.mrf.mxu0
        %v520 = vadd.f32 %v228, %v519
        %v521 = vpop.f32.mrf.mxu0
        %v522 = vadd.f32 %v232, %v521
        %v523 = vpop.f32.mrf.mxu0
        %v524 = vadd.f32 %v228, %v523
        %v525 = vpop.f32.mrf.mxu0
        %v526 = vadd.f32 %v232, %v525
        %527 = vmatprep.mubr.bf16.mxu0 %v288
        %528 = vmatmul.mubr.bf16.gmra.mxu0 %v287
        %v529 = vpop.f32.mrf.mxu0
        %v530 = vadd.f32 %v228, %v529
        %v531 = vpop.f32.mrf.mxu0
        %v532 = vadd.f32 %v232, %v531
        %v533 = vpop.f32.mrf.mxu0
        %v534 = vadd.f32 %v228, %v533
        %v535 = vpop.f32.mrf.mxu0
        %v536 = vadd.f32 %v232, %v535
        %537 = vmatprep.mubr.bf16.mxu0 %v290
        %538 = vmatmul.mubr.bf16.gmra.mxu0 %v289
        %v539 = vpop.f32.mrf.mxu0
        %v540 = vadd.f32 %v228, %v539
        %v541 = vpop.f32.mrf.mxu0
        %v542 = vadd.f32 %v232, %v541
        %v543 = vpop.f32.mrf.mxu0
        %v544 = vadd.f32 %v228, %v543
        %v545 = vpop.f32.mrf.mxu0
        %v546 = vadd.f32 %v232, %v545
        %547 = vmatprep.mubr.bf16.mxu0 %v292
        %548 = vmatmul.mubr.bf16.gmra.mxu0 %v291
        %v549 = vpop.f32.mrf.mxu0
        %v550 = vadd.f32 %v228, %v549
        %v551 = vpop.f32.mrf.mxu0
        %v552 = vadd.f32 %v232, %v551
        %v553 = vpop.f32.mrf.mxu0
        %v554 = vadd.f32 %v228, %v553
        %v555 = vpop.f32.mrf.mxu0
        %v556 = vadd.f32 %v232, %v555
        %557 = vmatprep.mubr.bf16.mxu0 %v294
        %558 = vmatmul.mubr.bf16.gmra.mxu0 %v293
        %v559 = vpop.f32.mrf.mxu0
        %v560 = vadd.f32 %v228, %v559
        %v561 = vpop.f32.mrf.mxu0
        %v562 = vadd.f32 %v232, %v561
        %v563 = vpop.f32.mrf.mxu0
        %v564 = vadd.f32 %v228, %v563
        %v565 = vpop.f32.mrf.mxu0
        %v566 = vadd.f32 %v232, %v565
        %567 = vmatprep.mubr.bf16.mxu0 %v296
        %568 = vmatmul.mubr.bf16.gmra.mxu0 %v295
        %v569 = vpop.f32.mrf.mxu0
        %v570 = vadd.f32 %v228, %v569
        %v571 = vpop.f32.mrf.mxu0
        %v572 = vadd.f32 %v232, %v571
        %v573 = vpop.f32.mrf.mxu0
        %v574 = vadd.f32 %v228, %v573
        %v575 = vpop.f32.mrf.mxu0
        %v576 = vadd.f32 %v232, %v575
        %577 = vmatprep.mubr.bf16.mxu0 %v298
        %578 = vmatmul.mubr.bf16.gmra.mxu0 %v297
        %v579 = vpop.f32.mrf.mxu0
        %v580 = vadd.f32 %v228, %v579
        %v581 = vpop.f32.mrf.mxu0
        %v582 = vadd.f32 %v232, %v581
        %v583 = vpop.f32.mrf.mxu0
        %v584 = vadd.f32 %v228, %v583
        %v585 = vpop.f32.mrf.mxu0
        %v586 = vadd.f32 %v232, %v585
        %587 = vdwg.mxu0
        %588 = vst [vmem:[%s166] sm:$0xff] %v510
        %589 = vst [vmem:[%s166 + $0x8] sm:$0xff] %v512
        %590 = vst [vmem:[%s166 + $0x10] sm:$0xff] %v514
        %591 = vst [vmem:[%s166 + $0x18] sm:$0xff] %v516
        %592 = vst [vmem:[%s166 + $0x20] sm:$0xff] %v520
        %593 = vst [vmem:[%s166 + $0x28] sm:$0xff] %v522
        %594 = vst [vmem:[%s166 + $0x30] sm:$0xff] %v524
        %595 = vst [vmem:[%s166 + $0x38] sm:$0xff] %v526
        %596 = vst [vmem:[%s166 + $0x40] sm:$0xff] %v530
        %597 = vst [vmem:[%s166 + $0x48] sm:$0xff] %v532
        %598 = vst [vmem:[%s166 + $0x50] sm:$0xff] %v534
        %599 = vst [vmem:[%s166 + $0x58] sm:$0xff] %v536
        %600 = vst [vmem:[%s166 + $0x60] sm:$0xff] %v540
        %601 = vst [vmem:[%s166 + $0x68] sm:$0xff] %v542
        %602 = vst [vmem:[%s166 + $0x70] sm:$0xff] %v544
        %603 = vst [vmem:[%s166 + $0x78] sm:$0xff] %v546
        %604 = vst [vmem:[%s166 + $0x80] sm:$0xff] %v550
        %605 = vst [vmem:[%s166 + $0x88] sm:$0xff] %v552
        %606 = vst [vmem:[%s166 + $0x90] sm:$0xff] %v554
        %607 = vst [vmem:[%s166 + $0x98] sm:$0xff] %v556
        %608 = vst [vmem:[%s166 + $0xa0] sm:$0xff] %v560
        %609 = vst [vmem:[%s166 + $0xa8] sm:$0xff] %v562
        %610 = vst [vmem:[%s166 + $0xb0] sm:$0xff] %v564
        %611 = vst [vmem:[%s166 + $0xb8] sm:$0xff] %v566
        %612 = vst [vmem:[%s166 + $0xc0] sm:$0xff] %v570
        %613 = vst [vmem:[%s166 + $0xc8] sm:$0xff] %v572
        %614 = vst [vmem:[%s166 + $0xd0] sm:$0xff] %v574
        %615 = vst [vmem:[%s166 + $0xd8] sm:$0xff] %v576
        %616 = vst [vmem:[%s166 + $0xe0] sm:$0xff] %v580
        %617 = vst [vmem:[%s166 + $0xe8] sm:$0xff] %v582
        %618 = vst [vmem:[%s166 + $0xf0] sm:$0xff] %v584
        %619 = vst [vmem:[%s166 + $0xf8] sm:$0xff] %v586
        %s620 = sand.u32 %s93, 1
        %s621 = scalar_lea.sflag [#allocation3], %s620
        %s622 = sand.u32 %s93, 1
        %s623 = smul.addr %s622, 256
        %s624 = scalar_lea.vmem [#allocation2], %s623
        // Predicated region
        $region33: #{autoencoder_forward.1} parent=31 // pred_check
          %p625 = pneg %p103
        $region34: #{autoencoder_forward.1} parent=31 // pred_check_branch
          %627 = sbr.rel (%p625) target = $region36
        $region35: #{autoencoder_forward.1} parent=31 // pred_region
          %s628 = smul.u32 16, %s17
          %s630 = ssub.s32 4096, 4096
          %631 = vsyncadd %s621, %s630
          %s632 = smul.addr %s628, 2
          %s633 = smul.addr %s632, 128
          %s634 = scalar_lea.hbm %s3, %s633
          %s635 = sshll.u32 %s624, 4
          %s636 = int_to_ptr.vmem [resolvable:$true] %s635
          %641 = dma.vmem_to_hbm [thread:$0]  %s636, 4096, %s634, %s621, 256, 256, 16
        $region36: #{autoencoder_forward.1} parent=31 // pred_fallthru
          _
      $region32: #{autoencoder_forward.1} parent=5 // pred_fallthru
        _
      %p642 = scmp.le.s32.totalorder 2, %s12
      // Predicated region
      $region37: #{autoencoder_forward.1} parent=5 // pred_check
        %p643 = pneg %p642
      $region38: #{autoencoder_forward.1} parent=5 // pred_check_branch
        %645 = sbr.rel (%p643) target = $region40
      $region39: #{autoencoder_forward.1} parent=5 // pred_region
        %s646 = ssub.s32 %s12, 2
        // Predicated region
        $region41: #{autoencoder_forward.1} parent=39 // pred_check
          %p647 = pneg %p109
        $region42: #{autoencoder_forward.1} parent=39 // pred_check_branch
          %649 = sbr.rel (%p647) target = $region44
        $region43: #{autoencoder_forward.1} parent=39 // pred_region
          %s650 = sand.u32 %s94, 1
          %s651 = scalar_lea.sflag [#allocation3], %s650
          %s652 = sand.u32 %s94, 1
          %s653 = smul.addr %s652, 256
          %s654 = scalar_lea.vmem [#allocation2], %s653
          %655 = dma.done %s651, 4096
        $region44: #{autoencoder_forward.1} parent=39 // pred_fallthru
          _
      $region40: #{autoencoder_forward.1} parent=5 // pred_fallthru
        _
    $region6: #{autoencoder_forward.1} parent=1 // loop_footer
      %s16 = sadd.s32 1, %s12
    $region7: #{autoencoder_forward.1} parent=1 // loop_footer_branch
      %11 = sbr.rel target = $region3
    $region8: #{autoencoder_forward.1} parent=1 // loop_exit
      _
    %656 = vsyncpa [#allocation3], 1
    %s657 = scalar_lea.sflag [#allocation3], 1
    %658 = vsyncpa %s657, 1

</llo_original>
